<compile_context>
chip_gen: v5e
topology: v5e:2x2
jax: 0.10.0
libtpu: 0.0.40
codegen_flags: <defaults>
</compile_context>

<pallas_src>
import functools
import math

import jax
import jax.numpy as jnp
from jax.experimental import pallas as pl
from jax.experimental.pallas import tpu as pltpu

# RReLU eval-mode slope: (lower + upper) / 2 with PyTorch defaults 1/8, 1/3
_RRELU_SLOPE = (1.0 / 8.0 + 1.0 / 3.0) / 2.0
_BN_EPS = 1e-5
_LANE = 128


def _round_up(n, m):
    return ((n + m - 1) // m) * m


def _pad2(a, rows, cols):
    return jnp.pad(a, ((0, rows - a.shape[0]), (0, cols - a.shape[1])))


# ---------------------------------------------------------------------------
# Fused Pallas kernel: the whole MLP in one body
# ---------------------------------------------------------------------------
def _fused_mlp_kernel(*refs, num_hidden):
    """refs = (x, [w, b, scale, neg_scale, shift] * num_hidden, w_last, b_last, out)

    x:         [tm, Din_pad]      f32
    w:         [Din_pad, Dout_pad] bf16 (zero padded)
    b/scale/neg_scale/shift: [1, Dout_pad] f32
    out:       [tm, Dout_last_pad] f32
    """
    x_ref = refs[0]
    o_ref = refs[-1]
    layer_refs = refs[1:-1]

    h = x_ref[...]  # f32 activations
    pos = 0
    for _ in range(num_hidden):
        w_ref, b_ref, scale_ref, neg_scale_ref, shift_ref = layer_refs[pos:pos + 5]
        pos += 5
        # Linear: bf16 MXU matmul, f32 accumulation.
        acc = jnp.dot(h.astype(jnp.bfloat16), w_ref[...],
                      preferred_element_type=jnp.float32)
        y = acc + b_ref[...]
        # RReLU(eval) + BatchNorm1d(eval), slope folded into scale:
        #   y_out = where(y>=0, y*scale, y*(slope*scale)) + shift
        m = jnp.where(y >= 0.0, scale_ref[...], neg_scale_ref[...])
        h = y * m + shift_ref[...]
        # Dropout: identity in eval mode.

    w_ref, b_ref = layer_refs[pos:pos + 2]
    acc = jnp.dot(h.astype(jnp.bfloat16), w_ref[...],
                  preferred_element_type=jnp.float32)
    o_ref[...] = (acc + b_ref[...]).astype(o_ref.dtype)


# ---------------------------------------------------------------------------
# Parameter init (mimics nn.Linear / nn.BatchNorm1d defaults)
# ---------------------------------------------------------------------------
def init_mlp_params(key, layers):
    params = []
    for idx, (din, dout) in enumerate(layers):
        key, kw, kb = jax.random.split(key, 3)
        bound = 1.0 / math.sqrt(din)
        # stored as [Din, Dout] (transpose of PyTorch's [out, in])
        w = jax.random.uniform(kw, (din, dout), jnp.float32, -bound, bound)
        b = jax.random.uniform(kb, (1, dout), jnp.float32, -bound, bound)
        layer = {"w": w, "b": b}
        if idx < len(layers) - 1:
            # BatchNorm1d init: gamma=1, beta=0, running_mean=0, running_var=1
            gamma = jnp.ones((1, dout), jnp.float32)
            beta = jnp.zeros((1, dout), jnp.float32)
            running_mean = jnp.zeros((1, dout), jnp.float32)
            running_var = jnp.ones((1, dout), jnp.float32)
            scale = gamma / jnp.sqrt(running_var + _BN_EPS)
            shift = beta - running_mean * scale
            layer["scale"] = scale
            layer["shift"] = shift
        params.append(layer)
    return params


def _prepare_padded_params(params):
    """Zero-pad all feature dims to multiples of 128, cast weights to bf16,
    and fold the RReLU slope into an extra per-column multiplier."""
    padded = []
    for layer in params:
        din, dout = layer["w"].shape
        din_p = _round_up(din, _LANE)
        dout_p = _round_up(dout, _LANE)
        entry = {
            "w": _pad2(layer["w"], din_p, dout_p).astype(jnp.bfloat16),
            "b": _pad2(layer["b"], 1, dout_p),
        }
        if "scale" in layer:
            scale = _pad2(layer["scale"], 1, dout_p)
            entry["scale"] = scale
            entry["neg_scale"] = scale * _RRELU_SLOPE
            entry["shift"] = _pad2(layer["shift"], 1, dout_p)
        padded.append(entry)
    return padded


# ---------------------------------------------------------------------------
# Fused forward
# ---------------------------------------------------------------------------
@jax.jit
def mlp_forward(params, x):
    num_hidden = len(params) - 1
    B, Din = x.shape
    Dout_final = params[-1]["w"].shape[1]

    padded = _prepare_padded_params(params)
    Din_pad = padded[0]["w"].shape[0]
    Dout_pad = padded[-1]["w"].shape[1]

    # Batch tile: whole (8-rounded) batch for small B, 256-row tiles otherwise.
    tm = 256 if B > 256 else _round_up(max(B, 8), 8)
    B_pad = _round_up(B, tm)

    x_pad = _pad2(x.astype(jnp.float32), B_pad, Din_pad)

    # Build args + specs: x is blocked over the batch grid, weights/bias/BN
    # params use a constant index_map so they stay VMEM-resident.
    const_map = lambda i: (0, 0)
    args = [x_pad]
    in_specs = [pl.BlockSpec((tm, Din_pad), lambda i: (i, 0))]
    for layer in padded[:-1]:
        for name in ("w", "b", "scale", "neg_scale", "shift"):
            a = layer[name]
            args.append(a)
            in_specs.append(pl.BlockSpec(a.shape, const_map))
    for name in ("w", "b"):
        a = padded[-1][name]
        args.append(a)
        in_specs.append(pl.BlockSpec(a.shape, const_map))

    out_specs = pl.BlockSpec((tm, Dout_pad), lambda i: (i, 0))

    flops = 2 * B_pad * sum(l["w"].shape[0] * l["w"].shape[1] for l in padded)
    bytes_accessed = (
        x_pad.size * x_pad.dtype.itemsize
        + sum(int(a.size) * a.dtype.itemsize for a in args[1:])
        + B_pad * Dout_pad * 4
    )

    kernel = functools.partial(_fused_mlp_kernel, num_hidden=num_hidden)
    out = pl.pallas_call(
        kernel,
        out_shape=jax.ShapeDtypeStruct((B_pad, Dout_pad), jnp.float32),
        grid=(B_pad // tm,),
        in_specs=in_specs,
        out_specs=out_specs,
        compiler_params=pltpu.CompilerParams(
            dimension_semantics=("parallel",)),
        cost_estimate=pl.CostEstimate(
            flops=flops, transcendentals=0, bytes_accessed=bytes_accessed),
    )(*args)

    return out[:B, :Dout_final]


# ---------------------------------------------------------------------------
# Pure-JAX references
# ---------------------------------------------------------------------------
def mlp_reference_bf16(params, x):
    """Same arithmetic as the kernel (bf16 matmul inputs, f32 accumulate)."""
    h = x.astype(jnp.float32)
    for layer in params[:-1]:
        y = jnp.dot(h.astype(jnp.bfloat16), layer["w"].astype(jnp.bfloat16),
                    preferred_element_type=jnp.float32) + layer["b"]
        m = jnp.where(y >= 0.0, layer["scale"], _RRELU_SLOPE * layer["scale"])
        h = y * m + layer["shift"]
    last = params[-1]
    return jnp.dot(h.astype(jnp.bfloat16), last["w"].astype(jnp.bfloat16),
                   preferred_element_type=jnp.float32) + last["b"]


def mlp_reference_f32(params, x):
    h = x
    for layer in params[:-1]:
        y = h @ layer["w"] + layer["b"]
        y = jnp.where(y >= 0.0, y, _RRELU_SLOPE * y)
        h = y * layer["scale"] + layer["shift"]
    last = params[-1]
    return h @ last["w"] + last["b"]


if __name__ == "__main__":
    # layers = [(in, out), ...] as in the PyTorch module
    layers = [(32, 64), (64, 48), (48, 16)]
    batch = 8

    key = jax.random.PRNGKey(0)
    key, kx = jax.random.split(key)
    x = jax.random.normal(kx, (batch, layers[0][0]), jnp.float32)

    params = init_mlp_params(key, layers)

    out = mlp_forward(params, x)
    out = jax.block_until_ready(out)
    assert out.shape == (batch, layers[-1][1])

    # Tight check vs a reference using identical (bf16-matmul) arithmetic.
    ref_bf16 = mlp_reference_bf16(params, x)
    assert jnp.allclose(out, ref_bf16, atol=2e-2, rtol=2e-2)

    # Loose sanity check vs the full-f32 reference (bf16 rounding tolerance).
    ref_f32 = mlp_reference_f32(params, x)
    assert jnp.allclose(out, ref_f32, atol=1e-1, rtol=1e-1)

    # TODO(synk): training-mode RReLU/Dropout randomness and BatchNorm batch
    # statistics are not implemented; this is the eval-mode forward pass.
    print("KERNEL_OK")
</pallas_src>

<mosaic_0001>
module attributes {stable_mosaic.version = 11 : i64} {
  func.func @_fused_mlp_kernel(%arg0: i32, %arg1: memref<8x128xf32, #tpu.memory_space<vmem>>, %arg2: memref<128x128xbf16, #tpu.memory_space<vmem>>, %arg3: memref<1x128xf32, #tpu.memory_space<vmem>>, %arg4: memref<1x128xf32, #tpu.memory_space<vmem>>, %arg5: memref<1x128xf32, #tpu.memory_space<vmem>>, %arg6: memref<1x128xf32, #tpu.memory_space<vmem>>, %arg7: memref<128x128xbf16, #tpu.memory_space<vmem>>, %arg8: memref<1x128xf32, #tpu.memory_space<vmem>>, %arg9: memref<1x128xf32, #tpu.memory_space<vmem>>, %arg10: memref<1x128xf32, #tpu.memory_space<vmem>>, %arg11: memref<1x128xf32, #tpu.memory_space<vmem>>, %arg12: memref<128x128xbf16, #tpu.memory_space<vmem>>, %arg13: memref<1x128xf32, #tpu.memory_space<vmem>>, %arg14: memref<8x128xf32, #tpu.memory_space<vmem>>) attributes {dimension_semantics = [#tpu.dimension_semantics<parallel>], iteration_bounds = array<i64: 1>, scalar_prefetch = 0 : i64, scratch_operands = 0 : i64, tpu.core_type = #tpu.core_type<tc>, window_params = [{transform_indices = @transform_0, window_bounds = array<i64: 8, 128>}, {pipeline_mode = #tpu.pipeline_mode<synchronous>, transform_indices = @transform_1, window_bounds = array<i64: 128, 128>}, {pipeline_mode = #tpu.pipeline_mode<synchronous>, transform_indices = @transform_2, window_bounds = array<i64: 1, 128>}, {pipeline_mode = #tpu.pipeline_mode<synchronous>, transform_indices = @transform_3, window_bounds = array<i64: 1, 128>}, {pipeline_mode = #tpu.pipeline_mode<synchronous>, transform_indices = @transform_4, window_bounds = array<i64: 1, 128>}, {pipeline_mode = #tpu.pipeline_mode<synchronous>, transform_indices = @transform_5, window_bounds = array<i64: 1, 128>}, {pipeline_mode = #tpu.pipeline_mode<synchronous>, transform_indices = @transform_6, window_bounds = array<i64: 128, 128>}, {pipeline_mode = #tpu.pipeline_mode<synchronous>, transform_indices = @transform_7, window_bounds = array<i64: 1, 128>}, {pipeline_mode = #tpu.pipeline_mode<synchronous>, transform_indices = @transform_8, window_bounds = array<i64: 1, 128>}, {pipeline_mode = #tpu.pipeline_mode<synchronous>, transform_indices = @transform_9, window_bounds = array<i64: 1, 128>}, {pipeline_mode = #tpu.pipeline_mode<synchronous>, transform_indices = @transform_10, window_bounds = array<i64: 1, 128>}, {pipeline_mode = #tpu.pipeline_mode<synchronous>, transform_indices = @transform_11, window_bounds = array<i64: 128, 128>}, {pipeline_mode = #tpu.pipeline_mode<synchronous>, transform_indices = @transform_12, window_bounds = array<i64: 1, 128>}, {transform_indices = @transform_13, window_bounds = array<i64: 8, 128>}]} {
    %c0 = arith.constant 0 : index
    %c0_0 = arith.constant 0 : index
    %0 = vector.load %arg1[%c0, %c0_0] : memref<8x128xf32, #tpu.memory_space<vmem>>, vector<8x128xf32>
    %1 = arith.truncf %0 : vector<8x128xf32> to vector<8x128xbf16>
    %c0_1 = arith.constant 0 : index
    %c0_2 = arith.constant 0 : index
    %2 = vector.load %arg2[%c0_1, %c0_2] : memref<128x128xbf16, #tpu.memory_space<vmem>>, vector<128x128xbf16>
    %cst = arith.constant dense<0.000000e+00> : vector<8x128xf32>
    %3 = tpu.matmul %1, %2, %cst {dimension_numbers = #tpu.dot_dimension_numbers<[1], [0], [0], [1], [0, 0, 1, 1], [], []>} : vector<8x128xbf16>, vector<128x128xbf16>, vector<8x128xf32> -> vector<8x128xf32>
    %c0_3 = arith.constant 0 : index
    %c0_4 = arith.constant 0 : index
    %4 = vector.load %arg3[%c0_3, %c0_4] : memref<1x128xf32, #tpu.memory_space<vmem>>, vector<1x128xf32>
    %5 = vector.broadcast %4 : vector<1x128xf32> to vector<8x128xf32>
    %6 = arith.addf %3, %5 : vector<8x128xf32>
    %cst_5 = arith.constant 0.000000e+00 : f32
    %7 = vector.broadcast %cst_5 : f32 to vector<8x128xf32>
    %8 = arith.cmpf oge, %6, %7 : vector<8x128xf32>
    %c0_6 = arith.constant 0 : index
    %c0_7 = arith.constant 0 : index
    %9 = vector.load %arg4[%c0_6, %c0_7] : memref<1x128xf32, #tpu.memory_space<vmem>>, vector<1x128xf32>
    %c0_8 = arith.constant 0 : index
    %c0_9 = arith.constant 0 : index
    %10 = vector.load %arg5[%c0_8, %c0_9] : memref<1x128xf32, #tpu.memory_space<vmem>>, vector<1x128xf32>
    %11 = vector.shape_cast %9 : vector<1x128xf32> to vector<1x128xf32>
    %12 = vector.broadcast %11 : vector<1x128xf32> to vector<8x128xf32>
    %13 = vector.shape_cast %10 : vector<1x128xf32> to vector<1x128xf32>
    %14 = vector.broadcast %13 : vector<1x128xf32> to vector<8x128xf32>
    %15 = arith.select %8, %12, %14 : vector<8x128xi1>, vector<8x128xf32>
    %16 = arith.mulf %6, %15 : vector<8x128xf32>
    %c0_10 = arith.constant 0 : index
    %c0_11 = arith.constant 0 : index
    %17 = vector.load %arg6[%c0_10, %c0_11] : memref<1x128xf32, #tpu.memory_space<vmem>>, vector<1x128xf32>
    %18 = vector.broadcast %17 : vector<1x128xf32> to vector<8x128xf32>
    %19 = arith.addf %16, %18 : vector<8x128xf32>
    %20 = arith.truncf %19 : vector<8x128xf32> to vector<8x128xbf16>
    %c0_12 = arith.constant 0 : index
    %c0_13 = arith.constant 0 : index
    %21 = vector.load %arg7[%c0_12, %c0_13] : memref<128x128xbf16, #tpu.memory_space<vmem>>, vector<128x128xbf16>
    %cst_14 = arith.constant dense<0.000000e+00> : vector<8x128xf32>
    %22 = tpu.matmul %20, %21, %cst_14 {dimension_numbers = #tpu.dot_dimension_numbers<[1], [0], [0], [1], [0, 0, 1, 1], [], []>} : vector<8x128xbf16>, vector<128x128xbf16>, vector<8x128xf32> -> vector<8x128xf32>
    %c0_15 = arith.constant 0 : index
    %c0_16 = arith.constant 0 : index
    %23 = vector.load %arg8[%c0_15, %c0_16] : memref<1x128xf32, #tpu.memory_space<vmem>>, vector<1x128xf32>
    %24 = vector.broadcast %23 : vector<1x128xf32> to vector<8x128xf32>
    %25 = arith.addf %22, %24 : vector<8x128xf32>
    %cst_17 = arith.constant 0.000000e+00 : f32
    %26 = vector.broadcast %cst_17 : f32 to vector<8x128xf32>
    %27 = arith.cmpf oge, %25, %26 : vector<8x128xf32>
    %c0_18 = arith.constant 0 : index
    %c0_19 = arith.constant 0 : index
    %28 = vector.load %arg9[%c0_18, %c0_19] : memref<1x128xf32, #tpu.memory_space<vmem>>, vector<1x128xf32>
    %c0_20 = arith.constant 0 : index
    %c0_21 = arith.constant 0 : index
    %29 = vector.load %arg10[%c0_20, %c0_21] : memref<1x128xf32, #tpu.memory_space<vmem>>, vector<1x128xf32>
    %30 = vector.shape_cast %28 : vector<1x128xf32> to vector<1x128xf32>
    %31 = vector.broadcast %30 : vector<1x128xf32> to vector<8x128xf32>
    %32 = vector.shape_cast %29 : vector<1x128xf32> to vector<1x128xf32>
    %33 = vector.broadcast %32 : vector<1x128xf32> to vector<8x128xf32>
    %34 = arith.select %27, %31, %33 : vector<8x128xi1>, vector<8x128xf32>
    %35 = arith.mulf %25, %34 : vector<8x128xf32>
    %c0_22 = arith.constant 0 : index
    %c0_23 = arith.constant 0 : index
    %36 = vector.load %arg11[%c0_22, %c0_23] : memref<1x128xf32, #tpu.memory_space<vmem>>, vector<1x128xf32>
    %37 = vector.broadcast %36 : vector<1x128xf32> to vector<8x128xf32>
    %38 = arith.addf %35, %37 : vector<8x128xf32>
    %39 = arith.truncf %38 : vector<8x128xf32> to vector<8x128xbf16>
    %c0_24 = arith.constant 0 : index
    %c0_25 = arith.constant 0 : index
    %40 = vector.load %arg12[%c0_24, %c0_25] : memref<128x128xbf16, #tpu.memory_space<vmem>>, vector<128x128xbf16>
    %cst_26 = arith.constant dense<0.000000e+00> : vector<8x128xf32>
    %41 = tpu.matmul %39, %40, %cst_26 {dimension_numbers = #tpu.dot_dimension_numbers<[1], [0], [0], [1], [0, 0, 1, 1], [], []>} : vector<8x128xbf16>, vector<128x128xbf16>, vector<8x128xf32> -> vector<8x128xf32>
    %c0_27 = arith.constant 0 : index
    %c0_28 = arith.constant 0 : index
    %42 = vector.load %arg13[%c0_27, %c0_28] : memref<1x128xf32, #tpu.memory_space<vmem>>, vector<1x128xf32>
    %43 = vector.broadcast %42 : vector<1x128xf32> to vector<8x128xf32>
    %44 = arith.addf %41, %43 : vector<8x128xf32>
    %c0_29 = arith.constant 0 : index
    %c0_30 = arith.constant 0 : index
    %45 = vector.load %arg14[%c0_29, %c0_30] : memref<8x128xf32, #tpu.memory_space<vmem>>, vector<8x128xf32>
    tpu.vector_store %arg14[%c0_29, %c0_30], %44 {strides = array<i32>} : memref<8x128xf32, #tpu.memory_space<vmem>>, vector<8x128xf32>,
    return
  }
  func.func @transform_0(%arg0: i32) -> (i32, i32) {
    %c0_i32 = arith.constant 0 : i32
    %c0_i32_0 = arith.constant 0 : i32
    return %arg0, %c0_i32 : i32, i32
  }
  func.func @transform_1(%arg0: i32) -> (i32, i32) {
    %c0_i32 = arith.constant 0 : i32
    %c0_i32_0 = arith.constant 0 : i32
    %c0_i32_1 = arith.constant 0 : i32
    return %c0_i32, %c0_i32_0 : i32, i32
  }
  func.func @transform_2(%arg0: i32) -> (i32, i32) {
    %c0_i32 = arith.constant 0 : i32
    %c0_i32_0 = arith.constant 0 : i32
    %c0_i32_1 = arith.constant 0 : i32
    return %c0_i32, %c0_i32_0 : i32, i32
  }
  func.func @transform_3(%arg0: i32) -> (i32, i32) {
    %c0_i32 = arith.constant 0 : i32
    %c0_i32_0 = arith.constant 0 : i32
    %c0_i32_1 = arith.constant 0 : i32
    return %c0_i32, %c0_i32_0 : i32, i32
  }
  func.func @transform_4(%arg0: i32) -> (i32, i32) {
    %c0_i32 = arith.constant 0 : i32
    %c0_i32_0 = arith.constant 0 : i32
    %c0_i32_1 = arith.constant 0 : i32
    return %c0_i32, %c0_i32_0 : i32, i32
  }
  func.func @transform_5(%arg0: i32) -> (i32, i32) {
    %c0_i32 = arith.constant 0 : i32
    %c0_i32_0 = arith.constant 0 : i32
    %c0_i32_1 = arith.constant 0 : i32
    return %c0_i32, %c0_i32_0 : i32, i32
  }
  func.func @transform_6(%arg0: i32) -> (i32, i32) {
    %c0_i32 = arith.constant 0 : i32
    %c0_i32_0 = arith.constant 0 : i32
    %c0_i32_1 = arith.constant 0 : i32
    return %c0_i32, %c0_i32_0 : i32, i32
  }
  func.func @transform_7(%arg0: i32) -> (i32, i32) {
    %c0_i32 = arith.constant 0 : i32
    %c0_i32_0 = arith.constant 0 : i32
    %c0_i32_1 = arith.constant 0 : i32
    return %c0_i32, %c0_i32_0 : i32, i32
  }
  func.func @transform_8(%arg0: i32) -> (i32, i32) {
    %c0_i32 = arith.constant 0 : i32
    %c0_i32_0 = arith.constant 0 : i32
    %c0_i32_1 = arith.constant 0 : i32
    return %c0_i32, %c0_i32_0 : i32, i32
  }
  func.func @transform_9(%arg0: i32) -> (i32, i32) {
    %c0_i32 = arith.constant 0 : i32
    %c0_i32_0 = arith.constant 0 : i32
    %c0_i32_1 = arith.constant 0 : i32
    return %c0_i32, %c0_i32_0 : i32, i32
  }
  func.func @transform_10(%arg0: i32) -> (i32, i32) {
    %c0_i32 = arith.constant 0 : i32
    %c0_i32_0 = arith.constant 0 : i32
    %c0_i32_1 = arith.constant 0 : i32
    return %c0_i32, %c0_i32_0 : i32, i32
  }
  func.func @transform_11(%arg0: i32) -> (i32, i32) {
    %c0_i32 = arith.constant 0 : i32
    %c0_i32_0 = arith.constant 0 : i32
    %c0_i32_1 = arith.constant 0 : i32
    return %c0_i32, %c0_i32_0 : i32, i32
  }
  func.func @transform_12(%arg0: i32) -> (i32, i32) {
    %c0_i32 = arith.constant 0 : i32
    %c0_i32_0 = arith.constant 0 : i32
    %c0_i32_1 = arith.constant 0 : i32
    return %c0_i32, %c0_i32_0 : i32, i32
  }
  func.func @transform_13(%arg0: i32) -> (i32, i32) {
    %c0_i32 = arith.constant 0 : i32
    %c0_i32_0 = arith.constant 0 : i32
    return %arg0, %c0_i32 : i32, i32
  }
}

</mosaic_0001>

<llo_original>
// kernel: mlp_forward.1
$region0: #{mlp_forward.1}
  #allocation0 [shape = 'u32[]', space=smem, size = 0x4, offset = 0x4, fixed_abs, tag = 'smem constant byte address 0x4 - core index']
  #allocation1 [shape = 'u32[72,128]{1,0:T(1,128)}', space=vmem, size = 0x9000, scoped, tag = 'internal scratch']
  %s0 = inlined_call_operand.vmem [shape: f32[8,128], index: 0, kind: input, shape index: {}]
  %s1 = inlined_call_operand.vmem [shape: bf16[128,128], index: 1, kind: input, shape index: {}]
  %s2 = inlined_call_operand.vmem [shape: f32[1,128], index: 2, kind: input, shape index: {}]
  %s3 = inlined_call_operand.vmem [shape: f32[1,128], index: 3, kind: input, shape index: {}]
  %s4 = inlined_call_operand.vmem [shape: f32[1,128], index: 4, kind: input, shape index: {}]
  %s5 = inlined_call_operand.vmem [shape: f32[1,128], index: 5, kind: input, shape index: {}]
  %s6 = inlined_call_operand.vmem [shape: bf16[128,128], index: 6, kind: input, shape index: {}]
  %s7 = inlined_call_operand.vmem [shape: f32[1,128], index: 7, kind: input, shape index: {}]
  %s8 = inlined_call_operand.vmem [shape: f32[1,128], index: 8, kind: input, shape index: {}]
  %s9 = inlined_call_operand.vmem [shape: f32[1,128], index: 9, kind: input, shape index: {}]
  %s10 = inlined_call_operand.vmem [shape: f32[1,128], index: 10, kind: input, shape index: {}]
  %s11 = inlined_call_operand.vmem [shape: bf16[128,128], index: 11, kind: input, shape index: {}]
  %s12 = inlined_call_operand.vmem [shape: f32[1,128], index: 12, kind: input, shape index: {}]
  %s13 = inlined_call_operand.hbm [shape: f32[8,128], index: 13, kind: output, shape index: {}]
  %s14 = sld [smem:[#allocation0]]
  $region62: #{mlp_forward.1} parent=0
    _
  %s16 = ssub.s32 1, %s14
  %s17 = scalar_select 0, %s16, %s14
  $region1: #{mlp_forward.1} parent=0
    #allocation2 [shape = 'u8[4096]{0}', space=vmem, size = 0x1000, scoped, tag = 'output window, operand 0, single buffered']
    #allocation3 [shape = 's32[1]{0}', space=sflag, size = 0x4, scoped, tag = 'scoped memory for mlp_forward.1']
    %18 = vsyncpa [#allocation3], 0
    // Predicated region
    $region2: #{mlp_forward.1} parent=1 // pred_check
      _
    $region3: #{mlp_forward.1} parent=1 // pred_check_branch
      %20 = sbr.rel (0) target = $region5
    $region4: #{mlp_forward.1} parent=1 // pred_region
      _
    $region5: #{mlp_forward.1} parent=1 // pred_fallthru
      _
    // Predicated region
    $region6: #{mlp_forward.1} parent=1 // pred_check
      _
    $region7: #{mlp_forward.1} parent=1 // pred_check_branch
      %22 = sbr.rel (0) target = $region9
    $region8: #{mlp_forward.1} parent=1 // pred_region
      _
    $region9: #{mlp_forward.1} parent=1 // pred_fallthru
      _
    // Predicated region
    $region10: #{mlp_forward.1} parent=1 // pred_check
      _
    $region11: #{mlp_forward.1} parent=1 // pred_check_branch
      %24 = sbr.rel (0) target = $region13
    $region12: #{mlp_forward.1} parent=1 // pred_region
      _
    $region13: #{mlp_forward.1} parent=1 // pred_fallthru
      _
    // Predicated region
    $region14: #{mlp_forward.1} parent=1 // pred_check
      _
    $region15: #{mlp_forward.1} parent=1 // pred_check_branch
      %26 = sbr.rel (0) target = $region17
    $region16: #{mlp_forward.1} parent=1 // pred_region
      _
    $region17: #{mlp_forward.1} parent=1 // pred_fallthru
      _
    // Predicated region
    $region18: #{mlp_forward.1} parent=1 // pred_check
      _
    $region19: #{mlp_forward.1} parent=1 // pred_check_branch
      %28 = sbr.rel (0) target = $region21
    $region20: #{mlp_forward.1} parent=1 // pred_region
      _
    $region21: #{mlp_forward.1} parent=1 // pred_fallthru
      _
    // Predicated region
    $region22: #{mlp_forward.1} parent=1 // pred_check
      _
    $region23: #{mlp_forward.1} parent=1 // pred_check_branch
      %30 = sbr.rel (0) target = $region25
    $region24: #{mlp_forward.1} parent=1 // pred_region
      _
    $region25: #{mlp_forward.1} parent=1 // pred_fallthru
      _
    // Predicated region
    $region26: #{mlp_forward.1} parent=1 // pred_check
      _
    $region27: #{mlp_forward.1} parent=1 // pred_check_branch
      %32 = sbr.rel (0) target = $region29
    $region28: #{mlp_forward.1} parent=1 // pred_region
      _
    $region29: #{mlp_forward.1} parent=1 // pred_fallthru
      _
    // Predicated region
    $region30: #{mlp_forward.1} parent=1 // pred_check
      _
    $region31: #{mlp_forward.1} parent=1 // pred_check_branch
      %34 = sbr.rel (0) target = $region33
    $region32: #{mlp_forward.1} parent=1 // pred_region
      _
    $region33: #{mlp_forward.1} parent=1 // pred_fallthru
      _
    // Predicated region
    $region34: #{mlp_forward.1} parent=1 // pred_check
      _
    $region35: #{mlp_forward.1} parent=1 // pred_check_branch
      %36 = sbr.rel (0) target = $region37
    $region36: #{mlp_forward.1} parent=1 // pred_region
      _
    $region37: #{mlp_forward.1} parent=1 // pred_fallthru
      _
    // Predicated region
    $region38: #{mlp_forward.1} parent=1 // pred_check
      _
    $region39: #{mlp_forward.1} parent=1 // pred_check_branch
      %38 = sbr.rel (0) target = $region41
    $region40: #{mlp_forward.1} parent=1 // pred_region
      _
    $region41: #{mlp_forward.1} parent=1 // pred_fallthru
      _
    // Predicated region
    $region42: #{mlp_forward.1} parent=1 // pred_check
      _
    $region43: #{mlp_forward.1} parent=1 // pred_check_branch
      %40 = sbr.rel (0) target = $region45
    $region44: #{mlp_forward.1} parent=1 // pred_region
      _
    $region45: #{mlp_forward.1} parent=1 // pred_fallthru
      _
    // Predicated region
    $region46: #{mlp_forward.1} parent=1 // pred_check
      _
    $region47: #{mlp_forward.1} parent=1 // pred_check_branch
      %42 = sbr.rel (0) target = $region49
    $region48: #{mlp_forward.1} parent=1 // pred_region
      _
    $region49: #{mlp_forward.1} parent=1 // pred_fallthru
      _
    // Predicated region
    $region50: #{mlp_forward.1} parent=1 // pred_check
      _
    $region51: #{mlp_forward.1} parent=1 // pred_check_branch
      %44 = sbr.rel (0) target = $region53
    $region52: #{mlp_forward.1} parent=1 // pred_region
      _
    $region53: #{mlp_forward.1} parent=1 // pred_fallthru
      _
    %v45 = vld [vmem:[%s0] sm:$0xff]
    %v46 = vpack.c.bf16 %v45, %v45
    %v47 = vld [vmem:[%s1] sm:$0xf]
    %v48 = vld [vmem:[%s1 + $0x4] sm:$0xf]
    %v49 = vld [vmem:[%s1 + $0x8] sm:$0xf]
    %v50 = vld [vmem:[%s1 + $0xc] sm:$0xf]
    %v51 = vld [vmem:[%s1 + $0x10] sm:$0xf]
    %v52 = vld [vmem:[%s1 + $0x14] sm:$0xf]
    %v53 = vld [vmem:[%s1 + $0x18] sm:$0xf]
    %v54 = vld [vmem:[%s1 + $0x1c] sm:$0xf]
    %v55 = vld [vmem:[%s1 + $0x20] sm:$0xf]
    %v56 = vld [vmem:[%s1 + $0x24] sm:$0xf]
    %v57 = vld [vmem:[%s1 + $0x28] sm:$0xf]
    %v58 = vld [vmem:[%s1 + $0x2c] sm:$0xf]
    %v59 = vld [vmem:[%s1 + $0x30] sm:$0xf]
    %v60 = vld [vmem:[%s1 + $0x34] sm:$0xf]
    %v61 = vld [vmem:[%s1 + $0x38] sm:$0xf]
    %v62 = vld [vmem:[%s1 + $0x3c] sm:$0xf]
    %v63 = vld [vmem:[%s2] sm:$0x1]
    %v65 = vperm.slane %v63, 0
    %v83 = vunpack.c.l.b16 %v47
    %v84 = vunpack.c.l.b16 %v48
    %v85 = vunpack.c.l.b16 %v49
    %v86 = vunpack.c.l.b16 %v50
    %v87 = vunpack.c.l.b16 %v51
    %v88 = vunpack.c.l.b16 %v52
    %v89 = vunpack.c.l.b16 %v53
    %v90 = vunpack.c.l.b16 %v54
    %v91 = vunpack.c.l.b16 %v55
    %v92 = vunpack.c.l.b16 %v56
    %v93 = vunpack.c.l.b16 %v57
    %v94 = vunpack.c.l.b16 %v58
    %v95 = vunpack.c.l.b16 %v59
    %v96 = vunpack.c.l.b16 %v60
    %v97 = vunpack.c.l.b16 %v61
    %v98 = vunpack.c.l.b16 %v62
    %v99 = vpack.c.b16 %v84, %v83
    %v100 = vpack.c.b16 %v86, %v85
    %v101 = vpack.c.b16 %v88, %v87
    %v102 = vpack.c.b16 %v90, %v89
    %v103 = vpack.c.b16 %v92, %v91
    %v104 = vpack.c.b16 %v94, %v93
    %v105 = vpack.c.b16 %v96, %v95
    %v106 = vpack.c.b16 %v98, %v97
    %115 = vmatpush.bf16.msra.mxu0 %v106
    %116 = vmatpush.bf16.msra.mxu0 %v105
    %117 = vmatpush.bf16.msra.mxu0 %v104
    %118 = vmatpush.bf16.msra.mxu0 %v103
    %119 = vmatpush.bf16.msra.mxu0 %v102
    %120 = vmatpush.bf16.msra.mxu0 %v101
    %121 = vmatpush.bf16.msra.mxu0 %v100
    %122 = vmatpush.bf16.msra.mxu0 %v99
    %123 = vmatmul.bf16.gmra.mxu0 %v46
    %v124 = vpop.f32.mrf.mxu0
    %v125 = vadd.f32 %v65, %v124
    %v126 = vpop.f32.mrf.mxu0
    %127 = vdwg.mxu0
    %vm128 = vcmp.ge.f32.partialorder %v125, 0.0
    %v129 = vld [vmem:[%s3] sm:$0x1]
    %v130 = vld [vmem:[%s4] sm:$0x1]
    %v132 = vperm.slane %v129, 0
    %v135 = vperm.slane %v130, 0
    %v137 = vsel %vm128, %v132, %v135
    %v138 = vmul.f32 %v125, %v137
    %v139 = vld [vmem:[%s5] sm:$0x1]
    %v141 = vperm.slane %v139, 0
    %v143 = vadd.f32 %v138, %v141
    %v144 = vpack.c.bf16 %v143, %v143
    %v145 = vld [vmem:[%s6] sm:$0xf]
    %v146 = vld [vmem:[%s6 + $0x4] sm:$0xf]
    %v147 = vld [vmem:[%s6 + $0x8] sm:$0xf]
    %v148 = vld [vmem:[%s6 + $0xc] sm:$0xf]
    %v149 = vld [vmem:[%s6 + $0x10] sm:$0xf]
    %v150 = vld [vmem:[%s6 + $0x14] sm:$0xf]
    %v151 = vld [vmem:[%s6 + $0x18] sm:$0xf]
    %v152 = vld [vmem:[%s6 + $0x1c] sm:$0xf]
    %v153 = vld [vmem:[%s6 + $0x20] sm:$0xf]
    %v154 = vld [vmem:[%s6 + $0x24] sm:$0xf]
    %v155 = vld [vmem:[%s6 + $0x28] sm:$0xf]
    %v156 = vld [vmem:[%s6 + $0x2c] sm:$0xf]
    %v157 = vld [vmem:[%s6 + $0x30] sm:$0xf]
    %v158 = vld [vmem:[%s6 + $0x34] sm:$0xf]
    %v159 = vld [vmem:[%s6 + $0x38] sm:$0xf]
    %v160 = vld [vmem:[%s6 + $0x3c] sm:$0xf]
    %v161 = vld [vmem:[%s7] sm:$0x1]
    %v163 = vperm.slane %v161, 0
    %v181 = vunpack.c.l.b16 %v145
    %v182 = vunpack.c.l.b16 %v146
    %v183 = vunpack.c.l.b16 %v147
    %v184 = vunpack.c.l.b16 %v148
    %v185 = vunpack.c.l.b16 %v149
    %v186 = vunpack.c.l.b16 %v150
    %v187 = vunpack.c.l.b16 %v151
    %v188 = vunpack.c.l.b16 %v152
    %v189 = vunpack.c.l.b16 %v153
    %v190 = vunpack.c.l.b16 %v154
    %v191 = vunpack.c.l.b16 %v155
    %v192 = vunpack.c.l.b16 %v156
    %v193 = vunpack.c.l.b16 %v157
    %v194 = vunpack.c.l.b16 %v158
    %v195 = vunpack.c.l.b16 %v159
    %v196 = vunpack.c.l.b16 %v160
    %v197 = vpack.c.b16 %v182, %v181
    %v198 = vpack.c.b16 %v184, %v183
    %v199 = vpack.c.b16 %v186, %v185
    %v200 = vpack.c.b16 %v188, %v187
    %v201 = vpack.c.b16 %v190, %v189
    %v202 = vpack.c.b16 %v192, %v191
    %v203 = vpack.c.b16 %v194, %v193
    %v204 = vpack.c.b16 %v196, %v195
    %213 = vmatpush.bf16.msra.mxu0 %v204
    %214 = vmatpush.bf16.msra.mxu0 %v203
    %215 = vmatpush.bf16.msra.mxu0 %v202
    %216 = vmatpush.bf16.msra.mxu0 %v201
    %217 = vmatpush.bf16.msra.mxu0 %v200
    %218 = vmatpush.bf16.msra.mxu0 %v199
    %219 = vmatpush.bf16.msra.mxu0 %v198
    %220 = vmatpush.bf16.msra.mxu0 %v197
    %221 = vmatmul.bf16.gmra.mxu0 %v144
    %v222 = vpop.f32.mrf.mxu0
    %v223 = vadd.f32 %v163, %v222
    %v224 = vpop.f32.mrf.mxu0
    %225 = vdwg.mxu0
    %vm226 = vcmp.ge.f32.partialorder %v223, 0.0
    %v227 = vld [vmem:[%s8] sm:$0x1]
    %v228 = vld [vmem:[%s9] sm:$0x1]
    %v230 = vperm.slane %v227, 0
    %v233 = vperm.slane %v228, 0
    %v235 = vsel %vm226, %v230, %v233
    %v236 = vmul.f32 %v223, %v235
    %v237 = vld [vmem:[%s10] sm:$0x1]
    %v239 = vperm.slane %v237, 0
    %v241 = vadd.f32 %v236, %v239
    %v242 = vpack.c.bf16 %v241, %v241
    %v243 = vld [vmem:[%s11] sm:$0xf]
    %v244 = vld [vmem:[%s11 + $0x4] sm:$0xf]
    %v245 = vld [vmem:[%s11 + $0x8] sm:$0xf]
    %v246 = vld [vmem:[%s11 + $0xc] sm:$0xf]
    %v247 = vld [vmem:[%s11 + $0x10] sm:$0xf]
    %v248 = vld [vmem:[%s11 + $0x14] sm:$0xf]
    %v249 = vld [vmem:[%s11 + $0x18] sm:$0xf]
    %v250 = vld [vmem:[%s11 + $0x1c] sm:$0xf]
    %v251 = vld [vmem:[%s11 + $0x20] sm:$0xf]
    %v252 = vld [vmem:[%s11 + $0x24] sm:$0xf]
    %v253 = vld [vmem:[%s11 + $0x28] sm:$0xf]
    %v254 = vld [vmem:[%s11 + $0x2c] sm:$0xf]
    %v255 = vld [vmem:[%s11 + $0x30] sm:$0xf]
    %v256 = vld [vmem:[%s11 + $0x34] sm:$0xf]
    %v257 = vld [vmem:[%s11 + $0x38] sm:$0xf]
    %v258 = vld [vmem:[%s11 + $0x3c] sm:$0xf]
    %v259 = vld [vmem:[%s12] sm:$0x1]
    %v261 = vperm.slane %v259, 0
    %v279 = vunpack.c.l.b16 %v243
    %v280 = vunpack.c.l.b16 %v244
    %v281 = vunpack.c.l.b16 %v245
    %v282 = vunpack.c.l.b16 %v246
    %v283 = vunpack.c.l.b16 %v247
    %v284 = vunpack.c.l.b16 %v248
    %v285 = vunpack.c.l.b16 %v249
    %v286 = vunpack.c.l.b16 %v250
    %v287 = vunpack.c.l.b16 %v251
    %v288 = vunpack.c.l.b16 %v252
    %v289 = vunpack.c.l.b16 %v253
    %v290 = vunpack.c.l.b16 %v254
    %v291 = vunpack.c.l.b16 %v255
    %v292 = vunpack.c.l.b16 %v256
    %v293 = vunpack.c.l.b16 %v257
    %v294 = vunpack.c.l.b16 %v258
    %v295 = vpack.c.b16 %v280, %v279
    %v296 = vpack.c.b16 %v282, %v281
    %v297 = vpack.c.b16 %v284, %v283
    %v298 = vpack.c.b16 %v286, %v285
    %v299 = vpack.c.b16 %v288, %v287
    %v300 = vpack.c.b16 %v290, %v289
    %v301 = vpack.c.b16 %v292, %v291
    %v302 = vpack.c.b16 %v294, %v293
    %311 = vmatpush.bf16.msra.mxu0 %v302
    %312 = vmatpush.bf16.msra.mxu0 %v301
    %313 = vmatpush.bf16.msra.mxu0 %v300
    %314 = vmatpush.bf16.msra.mxu0 %v299
    %315 = vmatpush.bf16.msra.mxu0 %v298
    %316 = vmatpush.bf16.msra.mxu0 %v297
    %317 = vmatpush.bf16.msra.mxu0 %v296
    %318 = vmatpush.bf16.msra.mxu0 %v295
    %319 = vmatmul.bf16.gmra.mxu0 %v242
    %v320 = vpop.f32.mrf.mxu0
    %v321 = vadd.f32 %v261, %v320
    %v322 = vpop.f32.mrf.mxu0
    %323 = vdwg.mxu0
    %324 = vst [vmem:[#allocation2] sm:$0xff] %v321
    // Predicated region
    $region54: #{mlp_forward.1} parent=1 // pred_check
      _
    $region55: #{mlp_forward.1} parent=1 // pred_check_branch
      %326 = sbr.rel (0) target = $region57
    $region56: #{mlp_forward.1} parent=1 // pred_region
      %328 = vsyncadd [#allocation3], 0
      %s330 = sshll.u32 [#allocation2], 4
      %s331 = int_to_ptr.vmem [resolvable:$true] %s330
      %s332 = sshll.u32 %s13, 4
      %s333 = int_to_ptr.hbm [resolvable:$true] %s332
      %335 = dma.vmem_to_hbm [thread:$0]  %s331, 128, %s333, [#allocation3]
    $region57: #{mlp_forward.1} parent=1 // pred_fallthru
      _
    // Predicated region
    $region58: #{mlp_forward.1} parent=1 // pred_check
      _
    $region59: #{mlp_forward.1} parent=1 // pred_check_branch
      %337 = sbr.rel (0) target = $region61
    $region60: #{mlp_forward.1} parent=1 // pred_region
      %339 = dma.done [#allocation3], 128
    $region61: #{mlp_forward.1} parent=1 // pred_fallthru
      _
    %340 = vsyncpa [#allocation3], 1

</llo_original>
